<compile_context>
chip_gen: v7x
topology: tpu7x:2x2x1
jax: 0.10.0
libtpu: 0.0.40
codegen_flags: <defaults>
</compile_context>

<pallas_src>
import functools

import jax
import jax.numpy as jnp
from jax import lax
from jax.experimental import pallas as pl
from jax.experimental.pallas import tpu as pltpu

_EPS = 1e-6      # SoftNorm clamp eps
_BN_EPS = 1e-5   # nn.BatchNorm2d default eps


def _pow_p(xc, p):
    """xc ** p for xc > 0. Integer p stays on the 4-wide VPU; general p uses exp/log (EUP)."""
    ip = int(round(p))
    if abs(p - ip) < 1e-12 and 1 <= ip <= 4:
        r = xc
        for _ in range(ip - 1):
            r = r * xc
        return r
    return jnp.exp(p * jnp.log(xc))


def _root_p(s, p):
    """s ** (1/p) for s > 0 (applied only to the C-times-smaller reduced tensor)."""
    if p == 1.0:
        return s
    if p == 2.0:
        return jnp.sqrt(s)
    return jnp.exp(jnp.log(s) * (1.0 / p))


def _softnorm_kernel(x_ref, n_ref, ps_ref, ps2_ref, *, p, hw, s_tile):
    # x_ref : (1, C, s_tile, 128) native dtype
    # n_ref : (1, s_tile, 128) f32                  -- soft channel norm
    # ps_ref / ps2_ref : (1, 1, 1, 128) f32         -- masked partial sum / sum-of-squares
    t = pl.program_id(1)

    x = x_ref[...].astype(jnp.float32)              # convert-on-load; stream native dtype
    xc = jnp.maximum(x, _EPS)                       # strictly positive
    s = jnp.sum(_pow_p(xc, p), axis=1)              # channel reduce = VALU adds across slabs
    nm = _root_p(s, p)                              # (1, s_tile, 128)
    n_ref[...] = nm

    # Mask positions beyond the valid HW extent (ragged last grid tile; <128-col pad).
    # Use `where`, not multiply: OOB rows may hold garbage/NaN from stale VMEM.
    row = lax.broadcasted_iota(jnp.int32, nm.shape, 1)
    lane = lax.broadcasted_iota(jnp.int32, nm.shape, 2)
    flat = (t * s_tile + row) * 128 + lane
    nm_v = jnp.where(flat < hw, nm, 0.0)
    ps_ref[...] = jnp.sum(nm_v, axis=1, keepdims=True).reshape(1, 1, 1, 128)
    ps2_ref[...] = jnp.sum(nm_v * nm_v, axis=1, keepdims=True).reshape(1, 1, 1, 128)


def _choose_tiling(S, C, itemsize, B):
    """Pick s_tile (rows of 128 lanes), grid length nt, block bytes and a VMEM limit."""
    sub_mult = {4: 8, 2: 16, 1: 32}.get(itemsize, 8)    # min sublane tile per dtype
    try:
        info = pltpu.get_tpu_info()
        vmem_cap = int(getattr(info, "vmem_capacity_bytes", 64 << 20) or (64 << 20))
    except Exception:
        vmem_cap = 64 << 20
    # v7x: 64 MiB VMEM/TC -> ~4 MiB input blocks; v5e/v6e (128 MiB) can take ~8 MiB.
    target = (4 << 20) if vmem_cap <= (64 << 20) else (8 << 20)

    bytes_per_row = C * 128 * itemsize + 128 * 4        # x row + f32 norm row
    cap_rows = max(sub_mult, (target // bytes_per_row) // sub_mult * sub_mult)
    s_tile = S if S <= cap_rows else cap_rows           # s_tile==S (legal) or multiple of 8/16/32

    # Megacore friendliness (v7x has 2 TCs): keep the grid >= 2 steps when possible.
    if B == 1 and s_tile >= S and S > sub_mult:
        half = -(-S // 2)
        half = -(-half // sub_mult) * sub_mult
        if half < S:
            s_tile = half

    nt = -(-S // s_tile)
    in_block = C * s_tile * 128 * itemsize
    out_block = s_tile * 128 * 4
    # Size the scoped VMEM limit to actual need (double-buffered in+out) with headroom,
    # staying well inside the physical capacity (important on 64-MiB v7x).
    vmem_limit = int(min(max(4 * (in_block + out_block) + (2 << 20), 16 << 20),
                         vmem_cap * 3 // 4))
    return s_tile, nt, in_block, vmem_limit


def fg_branch(x, p=3.0, gamma=1.0, beta=0.0):
    """x: (B, C, H, W) -> attention map (B, 1, H, W), same dtype as x."""
    B, C, H, W = x.shape
    HW = H * W
    S = -(-HW // 128)
    hw_pad = S * 128

    xr = x.reshape(B, C, HW)                 # free metadata reshape
    if hw_pad != HW:
        # Rare fallback: <128 extra lanes when H*W isn't a multiple of 128. The pad lanes
        # are excluded from the statistics in-kernel and sliced off at the end.
        xr = jnp.pad(xr, ((0, 0), (0, 0), (0, hw_pad - HW)))
    xr = xr.reshape(B, C, S, 128)            # lane-dense layout, full vreg occupancy

    itemsize = jnp.dtype(x.dtype).itemsize
    s_tile, nt, in_block, vmem_limit = _choose_tiling(S, C, itemsize, B)

    p = float(p)
    int_p = abs(p - round(p)) < 1e-12 and 1 <= int(round(p)) <= 4

    x_spec = pl.BlockSpec((1, C, s_tile, 128), lambda b, t: (b, 0, t, 0))
    if in_block < (1 << 20) and B * nt >= 4:
        # Tiny blocks + long grid: deepen input pipelining to keep the DMA engine busy.
        x_spec = pl.BlockSpec((1, C, s_tile, 128), lambda b, t: (b, 0, t, 0),
                              pipeline_mode=pl.Buffered(3))

    norm, psum, psumsq = pl.pallas_call(
        functools.partial(_softnorm_kernel, p=p, hw=HW, s_tile=s_tile),
        out_shape=(
            jax.ShapeDtypeStruct((B, S, 128), jnp.float32),      # soft channel norm
            jax.ShapeDtypeStruct((B, nt, 1, 128), jnp.float32),  # per-tile sum(norm)
            jax.ShapeDtypeStruct((B, nt, 1, 128), jnp.float32),  # per-tile sum(norm^2)
        ),
        grid=(B, nt),
        in_specs=[x_spec],
        out_specs=(
            pl.BlockSpec((1, s_tile, 128), lambda b, t: (b, t, 0)),
            pl.BlockSpec((1, 1, 1, 128), lambda b, t: (b, t, 0, 0)),
            pl.BlockSpec((1, 1, 1, 128), lambda b, t: (b, t, 0, 0)),
        ),
        compiler_params=pltpu.CompilerParams(
            dimension_semantics=("parallel", "parallel"),
            vmem_limit_bytes=vmem_limit),
        cost_estimate=pl.CostEstimate(
            flops=5 * B * C * S * 128,
            transcendentals=(2 * B * S * 128) + (0 if int_p else 2 * B * C * S * 128),
            bytes_accessed=B * C * S * 128 * itemsize + 4 * B * S * 128),
    )(xr)

    # BatchNorm2d(1) training-mode stats (batch mean, biased variance over N*H*W) folded
    # with gamma/beta, then sigmoid -- plain XLA on the C-times-smaller norm tensor.
    n_valid = jnp.float32(B * HW)
    total = jnp.sum(psum, dtype=jnp.float32)
    total2 = jnp.sum(psumsq, dtype=jnp.float32)
    mean = total / n_valid
    var = jnp.maximum(total2 / n_valid - mean * mean, 0.0)   # biased variance, matches BN
    scale = jnp.float32(gamma) * lax.rsqrt(var + _BN_EPS)
    shift = jnp.float32(beta) - mean * scale
    att = jax.nn.sigmoid(norm * scale + shift)               # (B, S, 128)
    att = att.reshape(B, hw_pad)[:, :HW].reshape(B, 1, H, W)
    return att.astype(x.dtype)


if __name__ == "__main__":
    key = jax.random.PRNGKey(0)
    B, C, H, W = 2, 4, 16, 16
    x = jax.random.normal(key, (B, C, H, W), dtype=jnp.float32)

    # Deterministic parameters per SoftNorm.__init__: p=3, BN weight=1, bias=0.
    att = jax.block_until_ready(fg_branch(x, p=3.0, gamma=1.0, beta=0.0))

    # Pure-JAX reference (same math, outside Pallas).
    xc = jnp.maximum(x, _EPS)
    norm = jnp.sum(xc ** 3.0, axis=1, keepdims=True) ** (1.0 / 3.0)
    mean = jnp.mean(norm)
    var = jnp.mean((norm - mean) ** 2)
    ref = jax.nn.sigmoid((norm - mean) / jnp.sqrt(var + _BN_EPS))

    assert att.shape == (B, 1, H, W)
    assert jnp.max(jnp.abs(att - ref)) < 1e-4
    print("KERNEL_OK")
</pallas_src>

<mosaic_0001>
module attributes {stable_mosaic.version = 11 : i64} {
  func.func @_softnorm_kernel(%arg0: i32, %arg1: i32, %arg2: memref<1x4x2x128xf32, #tpu.memory_space<vmem>>, %arg3: memref<1x2x128xf32, #tpu.memory_space<vmem>>, %arg4: memref<1x1x1x128xf32, #tpu.memory_space<vmem>>, %arg5: memref<1x1x1x128xf32, #tpu.memory_space<vmem>>) attributes {dimension_semantics = [#tpu.dimension_semantics<parallel>, #tpu.dimension_semantics<parallel>], iteration_bounds = array<i64: 2, 1>, scalar_prefetch = 0 : i64, scratch_operands = 0 : i64, tpu.core_type = #tpu.core_type<tc>, window_params = [{transform_indices = @transform_0, window_bounds = array<i64: 1, 4, 2, 128>}, {transform_indices = @transform_1, window_bounds = array<i64: 1, 2, 128>}, {transform_indices = @transform_2, window_bounds = array<i64: 1, 1, 1, 128>}, {transform_indices = @transform_3, window_bounds = array<i64: 1, 1, 1, 128>}]} {
    %c0 = arith.constant 0 : index
    %c0_0 = arith.constant 0 : index
    %c0_1 = arith.constant 0 : index
    %c0_2 = arith.constant 0 : index
    %0 = vector.load %arg2[%c0, %c0_0, %c0_1, %c0_2] : memref<1x4x2x128xf32, #tpu.memory_space<vmem>>, vector<1x4x2x128xf32>
    %cst = arith.constant 9.99999997E-7 : f32
    %1 = vector.broadcast %cst : f32 to vector<1x4x2x128xf32>
    %2 = arith.maximumf %0, %1 : vector<1x4x2x128xf32>
    %3 = arith.mulf %2, %2 : vector<1x4x2x128xf32>
    %4 = arith.mulf %3, %2 : vector<1x4x2x128xf32>
    %cst_3 = arith.constant dense<0.000000e+00> : vector<1x2x128xf32>
    %5 = vector.multi_reduction <add>, %4, %cst_3 [1] : vector<1x4x2x128xf32> to vector<1x2x128xf32>
    %6 = math.log %5 : vector<1x2x128xf32>
    %cst_4 = arith.constant 0.333333343 : f32
    %7 = vector.broadcast %cst_4 : f32 to vector<1x2x128xf32>
    %8 = arith.mulf %6, %7 : vector<1x2x128xf32>
    %9 = math.exp %8 : vector<1x2x128xf32>
    %c0_5 = arith.constant 0 : index
    %c0_6 = arith.constant 0 : index
    %c0_7 = arith.constant 0 : index
    %10 = vector.load %arg3[%c0_5, %c0_6, %c0_7] : memref<1x2x128xf32, #tpu.memory_space<vmem>>, vector<1x2x128xf32>
    tpu.vector_store %arg3[%c0_5, %c0_6, %c0_7], %9 {strides = array<i32>} : memref<1x2x128xf32, #tpu.memory_space<vmem>>, vector<1x2x128xf32>,
    %11 = tpu.iota {dimensions = array<i32: 1>} : vector<1x2x128xi32>
    %12 = tpu.iota {dimensions = array<i32: 2>} : vector<1x2x128xi32>
    %c2_i32 = arith.constant 2 : i32
    %13 = arith.muli %arg1, %c2_i32 : i32
    %14 = vector.broadcast %13 : i32 to vector<1x2x128xi32>
    %15 = arith.addi %14, %11 : vector<1x2x128xi32>
    %c128_i32 = arith.constant 128 : i32
    %16 = vector.broadcast %c128_i32 : i32 to vector<1x2x128xi32>
    %17 = arith.muli %15, %16 : vector<1x2x128xi32>
    %18 = arith.addi %17, %12 : vector<1x2x128xi32>
    %c256_i32 = arith.constant 256 : i32
    %19 = vector.broadcast %c256_i32 : i32 to vector<1x2x128xi32>
    %20 = arith.cmpi slt, %18, %19 : vector<1x2x128xi32>
    %cst_8 = arith.constant 0.000000e+00 : f32
    %21 = vector.broadcast %cst_8 : f32 to vector<1x2x128xf32>
    %22 = arith.select %20, %9, %21 : vector<1x2x128xi1>, vector<1x2x128xf32>
    %cst_9 = arith.constant dense<0.000000e+00> : vector<1x128xf32>
    %23 = vector.multi_reduction <add>, %22, %cst_9 [1] : vector<1x2x128xf32> to vector<1x128xf32>
    %24 = vector.shape_cast %23 : vector<1x128xf32> to vector<1x1x128xf32>
    %25 = vector.shape_cast %24 : vector<1x1x128xf32> to vector<1x1x1x128xf32>
    %c0_10 = arith.constant 0 : index
    %c0_11 = arith.constant 0 : index
    %c0_12 = arith.constant 0 : index
    %c0_13 = arith.constant 0 : index
    %26 = vector.load %arg4[%c0_10, %c0_11, %c0_12, %c0_13] : memref<1x1x1x128xf32, #tpu.memory_space<vmem>>, vector<1x1x1x128xf32>
    tpu.vector_store %arg4[%c0_10, %c0_11, %c0_12, %c0_13], %25 {strides = array<i32>} : memref<1x1x1x128xf32, #tpu.memory_space<vmem>>, vector<1x1x1x128xf32>,
    %27 = arith.mulf %22, %22 : vector<1x2x128xf32>
    %cst_14 = arith.constant dense<0.000000e+00> : vector<1x128xf32>
    %28 = vector.multi_reduction <add>, %27, %cst_14 [1] : vector<1x2x128xf32> to vector<1x128xf32>
    %29 = vector.shape_cast %28 : vector<1x128xf32> to vector<1x1x128xf32>
    %30 = vector.shape_cast %29 : vector<1x1x128xf32> to vector<1x1x1x128xf32>
    %c0_15 = arith.constant 0 : index
    %c0_16 = arith.constant 0 : index
    %c0_17 = arith.constant 0 : index
    %c0_18 = arith.constant 0 : index
    %31 = vector.load %arg5[%c0_15, %c0_16, %c0_17, %c0_18] : memref<1x1x1x128xf32, #tpu.memory_space<vmem>>, vector<1x1x1x128xf32>
    tpu.vector_store %arg5[%c0_15, %c0_16, %c0_17, %c0_18], %30 {strides = array<i32>} : memref<1x1x1x128xf32, #tpu.memory_space<vmem>>, vector<1x1x1x128xf32>,
    return
  }
  func.func @transform_0(%arg0: i32, %arg1: i32) -> (i32, i32, i32, i32) {
    %c0_i32 = arith.constant 0 : i32
    %c0_i32_0 = arith.constant 0 : i32
    %c0_i32_1 = arith.constant 0 : i32
    return %arg0, %c0_i32, %arg1, %c0_i32_0 : i32, i32, i32, i32
  }
  func.func @transform_1(%arg0: i32, %arg1: i32) -> (i32, i32, i32) {
    %c0_i32 = arith.constant 0 : i32
    %c0_i32_0 = arith.constant 0 : i32
    return %arg0, %arg1, %c0_i32 : i32, i32, i32
  }
  func.func @transform_2(%arg0: i32, %arg1: i32) -> (i32, i32, i32, i32) {
    %c0_i32 = arith.constant 0 : i32
    %c0_i32_0 = arith.constant 0 : i32
    %c0_i32_1 = arith.constant 0 : i32
    return %arg0, %arg1, %c0_i32, %c0_i32_0 : i32, i32, i32, i32
  }
  func.func @transform_3(%arg0: i32, %arg1: i32) -> (i32, i32, i32, i32) {
    %c0_i32 = arith.constant 0 : i32
    %c0_i32_0 = arith.constant 0 : i32
    %c0_i32_1 = arith.constant 0 : i32
    return %arg0, %arg1, %c0_i32, %c0_i32_0 : i32, i32, i32, i32
  }
}

</mosaic_0001>

<llo_original>
// kernel: tpu_custom_call.1
$region0: #{tpu_custom_call.1}
  #allocation0 [shape = 'u32[]', space=smem, size = 0x4, offset = 0x4, fixed_abs, tag = 'smem constant byte address 0x4 - core index']
  #allocation1 [shape = 'u32[144,128]{1,0:T(1,128)}', space=vmem, size = 0x12000, scoped, tag = 'internal scratch']
  %s0 = inlined_call_operand.hbm [shape: f32[2,4,2,128], index: 0, kind: input, shape index: {}]
  %s1 = inlined_call_operand.hbm [shape: f32[2,2,128], index: 1, kind: output, shape index: {0}]
  %s2 = inlined_call_operand.hbm [shape: f32[2,1,1,128], index: 2, kind: output, shape index: {1}]
  %s3 = inlined_call_operand.hbm [shape: f32[2,1,1,128], index: 3, kind: output, shape index: {2}]
  %4 = xla_tuple %s1, %s2, %s3
  %s5 = sld [smem:[#allocation0]]
  $region57: #{tpu_custom_call.1} parent=0
    _
  %s7 = ssub.s32 1, %s5
  %s8 = scalar_select 0, %s7, %s5
  $region1: #{tpu_custom_call.1} parent=0
    #allocation2 [shape = 'u8[8192]{0}', space=vmem, size = 0x2000, scoped, tag = 'input window, operand 0']
    #allocation3 [shape = 's32[2]{0}', space=sflag, size = 0x8, scoped, tag = 'scoped memory for tpu_custom_call.1']
    #allocation4 [shape = 's32[2]{0}', space=sflag, size = 0x8, scoped, tag = 'scoped memory for tpu_custom_call.1']
    #allocation5 [shape = 'u8[2048]{0}', space=vmem, size = 0x800, scoped, tag = 'output window, operand 0']
    #allocation6 [shape = 'u8[1024]{0}', space=vmem, size = 0x400, scoped, tag = 'output window, operand 1']
    #allocation7 [shape = 's32[2]{0}', space=sflag, size = 0x8, scoped, tag = 'scoped memory for tpu_custom_call.1']
    #allocation8 [shape = 'u8[1024]{0}', space=vmem, size = 0x400, scoped, tag = 'output window, operand 2']
    %9 = vsyncpa [#allocation3], 0
    %s10 = scalar_lea.sflag [#allocation3], 1
    %11 = vsyncpa %s10, 0
    %12 = vsyncpa [#allocation4], 0
    %s13 = scalar_lea.sflag [#allocation4], 1
    %14 = vsyncpa %s13, 0
    %15 = vsyncpa [#allocation7], 0
    %s16 = scalar_lea.sflag [#allocation7], 1
    %17 = vsyncpa %s16, 0
    loop: start=0, step=1, limit=4
    $region2: #{tpu_custom_call.1} parent=1 // loop_pre_header
      _
    $region3: #{tpu_custom_call.1} parent=1 // loop_header
      %s19 = sphi 0, %s23
      %p20 = scmp.ge.s32.totalorder %s19, 4
      %s26 = sphi 0, %s38
      %s27 = sphi 0, %s34
      %s28 = sphi 0, %s26
      %s29 = sphi 0, %s27
      %s30 = sphi 0, %s28
      %s31 = sphi 0, %s29
      %s43 = sphi 0, %s45
      %s46 = sphi 0, %s43
      %s47 = sphi 0, %s46
      %s63 = sphi 0, %s47
      %s71 = sphi 0, %s73
      %s74 = sphi 0, %s71
      %s75 = sphi 0, %s74
      %s91 = sphi 0, %s75
      %s99 = sphi 0, %s101
      %s102 = sphi 0, %s99
      %s103 = sphi 0, %s102
      %s119 = sphi 0, %s103
      %s127 = sphi 0, %s129
      %s130 = sphi 0, %s127
      %s131 = sphi 0, %s130
      %s147 = sphi 0, %s131
    $region4: #{tpu_custom_call.1} parent=1 // loop_header_branch
      %22 = sbr.rel (%p20) target = $region8
    $region5: #{tpu_custom_call.1} parent=1 // loop_body
      %s24 = ssub.s32 %s19, 1
      %s25 = ssub.s32 %s19, 2
      %s32 = sadd.s32 1, %s27
      %p33 = scmp.ge.s32.totalorder %s32, 1
      %s34 = scalar_select %p33, 0, %s32
      %s35 = sadd.s32 1, %s26
      %s36 = scalar_select %p33, %s35, %s26
      %p37 = scmp.ge.s32.totalorder %s36, 2
      %s38 = scalar_select %p37, 0, %s36
      %s39 = ssub.s32 %s26, %s38
      %s40 = ssub.s32 %s27, %s34
      %s41 = sor.u32 %s39, %s40
      %p42 = scmp.eq.s32.totalorder %s41, 0
      %s44 = sadd.s32 %s43, 1
      %s45 = scalar_select %p42, %s43, %s44
      %p48 = pneg %p42
      %p49 = scmp.eq.s32.totalorder %s19, 1
      %p50 = por %p48, %p49
      %p51 = scmp.ne.s32.totalorder %s43, %s46
      %p52 = scmp.eq.s32.totalorder %s19, 0
      %p53 = por %p51, %p52
      %p54 = scmp.ne.s32.totalorder %s43, %s46
      %p55 = scmp.eq.s32.totalorder %s24, 1
      %p56 = por %p54, %p55
      %p57 = scmp.ne.s32.totalorder %s46, %s47
      %p58 = scmp.eq.s32.totalorder %s24, 0
      %p59 = por %p57, %p58
      %p60 = scmp.ne.s32.totalorder %s46, %s47
      %p61 = scmp.eq.s32.totalorder %s25, 1
      %p62 = por %p60, %p61
      %p64 = scmp.ne.s32.totalorder %s47, %s63
      %p65 = scmp.eq.s32.totalorder %s25, 0
      %p66 = por %p64, %p65
      %s67 = ssub.s32 %s26, %s38
      %s68 = ssub.s32 %s27, %s34
      %s69 = sor.u32 %s67, %s68
      %p70 = scmp.eq.s32.totalorder %s69, 0
      %s72 = sadd.s32 %s71, 1
      %s73 = scalar_select %p70, %s71, %s72
      %p76 = pneg %p70
      %p77 = scmp.eq.s32.totalorder %s19, 1
      %p78 = por %p76, %p77
      %p79 = scmp.ne.s32.totalorder %s71, %s74
      %p80 = scmp.eq.s32.totalorder %s19, 0
      %p81 = por %p79, %p80
      %p82 = scmp.ne.s32.totalorder %s71, %s74
      %p83 = scmp.eq.s32.totalorder %s24, 1
      %p84 = por %p82, %p83
      %p85 = scmp.ne.s32.totalorder %s74, %s75
      %p86 = scmp.eq.s32.totalorder %s24, 0
      %p87 = por %p85, %p86
      %p88 = scmp.ne.s32.totalorder %s74, %s75
      %p89 = scmp.eq.s32.totalorder %s25, 1
      %p90 = por %p88, %p89
      %p92 = scmp.ne.s32.totalorder %s75, %s91
      %p93 = scmp.eq.s32.totalorder %s25, 0
      %p94 = por %p92, %p93
      %s95 = ssub.s32 %s26, %s38
      %s96 = ssub.s32 %s27, %s34
      %s97 = sor.u32 %s95, %s96
      %p98 = scmp.eq.s32.totalorder %s97, 0
      %s100 = sadd.s32 %s99, 1
      %s101 = scalar_select %p98, %s99, %s100
      %p104 = pneg %p98
      %p105 = scmp.eq.s32.totalorder %s19, 1
      %p106 = por %p104, %p105
      %p107 = scmp.ne.s32.totalorder %s99, %s102
      %p108 = scmp.eq.s32.totalorder %s19, 0
      %p109 = por %p107, %p108
      %p110 = scmp.ne.s32.totalorder %s99, %s102
      %p111 = scmp.eq.s32.totalorder %s24, 1
      %p112 = por %p110, %p111
      %p113 = scmp.ne.s32.totalorder %s102, %s103
      %p114 = scmp.eq.s32.totalorder %s24, 0
      %p115 = por %p113, %p114
      %p116 = scmp.ne.s32.totalorder %s102, %s103
      %p117 = scmp.eq.s32.totalorder %s25, 1
      %p118 = por %p116, %p117
      %p120 = scmp.ne.s32.totalorder %s103, %s119
      %p121 = scmp.eq.s32.totalorder %s25, 0
      %p122 = por %p120, %p121
      %s123 = ssub.s32 %s26, %s38
      %s124 = ssub.s32 %s27, %s34
      %s125 = sor.u32 %s123, %s124
      %p126 = scmp.eq.s32.totalorder %s125, 0
      %s128 = sadd.s32 %s127, 1
      %s129 = scalar_select %p126, %s127, %s128
      %p132 = pneg %p126
      %p133 = scmp.eq.s32.totalorder %s19, 1
      %p134 = por %p132, %p133
      %p135 = scmp.ne.s32.totalorder %s127, %s130
      %p136 = scmp.eq.s32.totalorder %s19, 0
      %p137 = por %p135, %p136
      %p138 = scmp.ne.s32.totalorder %s127, %s130
      %p139 = scmp.eq.s32.totalorder %s24, 1
      %p140 = por %p138, %p139
      %p141 = scmp.ne.s32.totalorder %s130, %s131
      %p142 = scmp.eq.s32.totalorder %s24, 0
      %p143 = por %p141, %p142
      %p144 = scmp.ne.s32.totalorder %s130, %s131
      %p145 = scmp.eq.s32.totalorder %s25, 1
      %p146 = por %p144, %p145
      %p148 = scmp.ne.s32.totalorder %s131, %s147
      %p149 = scmp.eq.s32.totalorder %s25, 0
      %p150 = por %p148, %p149
      %p151 = scmp.le.s32.totalorder 1, %s19
      %p152 = scmp.lt.s32.totalorder %s19, 3
      %p153 = pnand %p151, %p152
      %p154 = pneg %p153
      // Predicated region
      $region9: #{tpu_custom_call.1} parent=5 // pred_check
        _
      $region10: #{tpu_custom_call.1} parent=5 // pred_check_branch
        %156 = sbr.rel (%p153) target = $region12
      $region11: #{tpu_custom_call.1} parent=5 // pred_region
        %s157 = ssub.s32 %s19, 1
      $region12: #{tpu_custom_call.1} parent=5 // pred_fallthru
        _
      %p158 = scmp.lt.s32.totalorder %s19, 2
      // Predicated region
      $region13: #{tpu_custom_call.1} parent=5 // pred_check
        %p159 = pneg %p158
      $region14: #{tpu_custom_call.1} parent=5 // pred_check_branch
        %161 = sbr.rel (%p159) target = $region16
      $region15: #{tpu_custom_call.1} parent=5 // pred_region
        // Predicated region
        $region17: #{tpu_custom_call.1} parent=15 // pred_check
          %p162 = pneg %p53
        $region18: #{tpu_custom_call.1} parent=15 // pred_check_branch
          %164 = sbr.rel (%p162) target = $region20
        $region19: #{tpu_custom_call.1} parent=15 // pred_region
          %s165 = sand.u32 %s43, 1
          %s166 = scalar_lea.sflag [#allocation3], %s165
          %s167 = sand.u32 %s43, 1
          %s168 = smul.addr %s167, 8
          %s169 = scalar_lea.vmem [#allocation2], %s168
          %s171 = ssub.s32 128, 128
          %172 = vsyncadd %s166, %s171
          %s173 = smul.addr %s26, 4
          %s174 = sadd.s32 %s27, %s173
          %s175 = smul.addr %s174, 32
          %s176 = scalar_lea.hbm %s0, %s175
          %s177 = sshll.u32 %s169, 4
          %s178 = int_to_ptr.vmem [resolvable:$true] %s177
          %183 = dma.hbm_to_vmem [thread:$0]  %s176, 128, %s178, %s166, 32, 32, 2
        $region20: #{tpu_custom_call.1} parent=15 // pred_fallthru
          _
      $region16: #{tpu_custom_call.1} parent=5 // pred_fallthru
        _
      %p184 = scmp.le.s32.totalorder 1, %s19
      %p185 = scmp.lt.s32.totalorder %s19, 3
      %p186 = pnand %p184, %p185
      %p187 = pneg %p186
      // Predicated region
      $region21: #{tpu_custom_call.1} parent=5 // pred_check
        _
      $region22: #{tpu_custom_call.1} parent=5 // pred_check_branch
        %189 = sbr.rel (%p186) target = $region24
      $region23: #{tpu_custom_call.1} parent=5 // pred_region
        %s190 = ssub.s32 %s19, 1
        %s191 = sand.u32 %s46, 1
        %s192 = scalar_lea.sflag [#allocation3], %s191
        %s193 = sand.u32 %s46, 1
        %s194 = smul.addr %s193, 8
        %s195 = scalar_lea.vmem [#allocation2], %s194
        // Predicated region
        $region25: #{tpu_custom_call.1} parent=23 // pred_check
          %p196 = pneg %p59
        $region26: #{tpu_custom_call.1} parent=23 // pred_check_branch
          %198 = sbr.rel (%p196) target = $region28
        $region27: #{tpu_custom_call.1} parent=23 // pred_region
          %199 = dma.done %s192, 128
        $region28: #{tpu_custom_call.1} parent=23 // pred_fallthru
          _
        %s200 = sand.u32 %s46, 1
        %s201 = scalar_lea.sflag [#allocation3], %s200
        %s202 = sand.u32 %s46, 1
        %s203 = smul.addr %s202, 8
        %s204 = scalar_lea.vmem [#allocation2], %s203
        %p205 = pneg %p59
        %p206 = pneg %p56
        %p207 = pneg %p87
        %p208 = pneg %p84
        %s209 = sand.u32 %s74, 1
        %s210 = scalar_lea.sflag [#allocation4], %s209
        %s211 = sand.u32 %s74, 1
        %s212 = smul.addr %s211, 2
        %s213 = scalar_lea.vmem [#allocation5], %s212
        %p214 = pneg %p115
        %p215 = pneg %p112
        %s216 = sand.u32 %s24, 1
        %s217 = scalar_lea.sflag [#allocation7], %s216
        %s218 = sand.u32 %s102, 1
        %s219 = scalar_lea.vmem [#allocation6], %s218
        %p220 = pneg %p143
        %p221 = pneg %p140
        %s222 = sand.u32 %s24, 1
        %s223 = scalar_lea.sflag [#allocation7], %s222
        %s224 = sand.u32 %s130, 1
        %s225 = scalar_lea.vmem [#allocation8], %s224
        %v226 = vld [vmem:[%s195] sm:$0x3]
        %v227 = vld [vmem:[%s195 + $0x2] sm:$0x3]
        %v228 = vld [vmem:[%s195 + $0x4] sm:$0x3]
        %v229 = vld [vmem:[%s195 + $0x6] sm:$0x3]
        %v230 = vmax.f32 %v226, 1e-06
        %v231 = vmax.f32 %v227, 1e-06
        %v232 = vmax.f32 %v228, 1e-06
        %v233 = vmax.f32 %v229, 1e-06
        %v234 = vmul.f32 %v230, %v230
        %v235 = vmul.f32 %v231, %v231
        %v236 = vmul.f32 %v232, %v232
        %v237 = vmul.f32 %v233, %v233
        %v238 = vmul.f32 %v234, %v230
        %v239 = vmul.f32 %v235, %v231
        %v240 = vmul.f32 %v236, %v232
        %v241 = vmul.f32 %v237, %v233
        %vm242 = vcmask 1041408
        %v243 = vsel %vm242, %v238, 0.0
        %v244 = vsel %vm242, %v239, 0.0
        %v245 = vadd.f32 %v243, %v244
        %v246 = vsel %vm242, %v240, 0.0
        %v247 = vadd.f32 %v245, %v246
        %v248 = vsel %vm242, %v241, 0.0
        %v249 = vadd.f32 %v247, %v248
        %v250 = vlog2.pop %v249
        %v251 = vmul.f32 %v250, 0.6931472
        %v252 = vmul.f32 %v251, 0.33333334
        %v253 = vmul.f32 %v252, 1.442695
        %v254 = vpow.pop %v253
        %255 = vst [vmem:[%s213] sm:$0x3] %v254
        %v256 = vlaneseq
        %v257 = vshrl.u32 %v256, 7
        %v258 = vlaneseq
        %v259 = vand.u32 %v258, 127
        %s260 = smul.u32 %s29, 2
        %v261 = vstv %s260
        %v262 = vadd.s32 %v261, %v257
        %v263 = vmul.u32 %v262, 128
        %v264 = vadd.s32 %v263, %v259
        %vm265 = vcmp.lt.s32.totalorder %v264, 256
        %v266 = vsel %vm265, %v254, 0.0
        %v267 = vsel %vm242, %v266, 0.0
        %v268 = vrot.slane %v267, 4
        %v269 = vadd.f32 %v267, %v268
        %v270 = vrot.slane %v269, 2
        %v271 = vadd.f32 %v269, %v270
        %v272 = vrot.slane %v271, 1
        %v273 = vadd.f32 %v271, %v272
        %274 = vst [vmem:[%s219] sm:$0x1] %v273
        %v275 = vmul.f32 %v266, %v266
        %v276 = vsel %vm242, %v275, 0.0
        %v277 = vrot.slane %v276, 4
        %v278 = vadd.f32 %v276, %v277
        %v279 = vrot.slane %v278, 2
        %v280 = vadd.f32 %v278, %v279
        %v281 = vrot.slane %v280, 1
        %v282 = vadd.f32 %v280, %v281
        %283 = vst [vmem:[%s225] sm:$0x1] %v282
        %s284 = sand.u32 %s74, 1
        %s285 = scalar_lea.sflag [#allocation4], %s284
        %s286 = sand.u32 %s74, 1
        %s287 = smul.addr %s286, 2
        %s288 = scalar_lea.vmem [#allocation5], %s287
        %s289 = sand.u32 %s24, 1
        %s290 = scalar_lea.sflag [#allocation7], %s289
        %s291 = sand.u32 %s102, 1
        %s292 = scalar_lea.vmem [#allocation6], %s291
        %s293 = sand.u32 %s24, 1
        %s294 = scalar_lea.sflag [#allocation7], %s293
        %s295 = sand.u32 %s130, 1
        %s296 = scalar_lea.vmem [#allocation8], %s295
        // Predicated region
        $region29: #{tpu_custom_call.1} parent=23 // pred_check
          %p297 = pneg %p84
        $region30: #{tpu_custom_call.1} parent=23 // pred_check_branch
          %299 = sbr.rel (%p297) target = $region32
        $region31: #{tpu_custom_call.1} parent=23 // pred_region
          %s301 = ssub.s32 32, 32
          %302 = vsyncadd %s285, %s301
          %s303 = sadd.s32 %s29, %s28
          %s304 = smul.addr %s303, 32
          %s305 = scalar_lea.hbm %s1, %s304
          %s307 = sshll.u32 %s288, 4
          %s308 = int_to_ptr.vmem [resolvable:$true] %s307
          %310 = dma.vmem_to_hbm [thread:$0]  %s308, 32, %s305, %s285
        $region32: #{tpu_custom_call.1} parent=23 // pred_fallthru
          _
        // Predicated region
        $region33: #{tpu_custom_call.1} parent=23 // pred_check
          %p311 = pneg %p112
        $region34: #{tpu_custom_call.1} parent=23 // pred_check_branch
          %313 = sbr.rel (%p311) target = $region36
        $region35: #{tpu_custom_call.1} parent=23 // pred_region
          %s315 = ssub.s32 16, 16
          %316 = vsyncadd %s290, %s315
          %s317 = sadd.s32 %s29, %s28
          %s318 = smul.addr %s317, 16
          %s319 = scalar_lea.hbm %s2, %s318
          %s321 = sshll.u32 %s292, 4
          %s322 = int_to_ptr.vmem [resolvable:$true] %s321
          %324 = dma.vmem_to_hbm [thread:$0]  %s322, 16, %s319, %s290
        $region36: #{tpu_custom_call.1} parent=23 // pred_fallthru
          _
        // Predicated region
        $region37: #{tpu_custom_call.1} parent=23 // pred_check
          %p325 = pneg %p140
        $region38: #{tpu_custom_call.1} parent=23 // pred_check_branch
          %327 = sbr.rel (%p325) target = $region40
        $region39: #{tpu_custom_call.1} parent=23 // pred_region
          %s329 = ssub.s32 16, 16
          %330 = vsyncadd %s294, %s329
          %s331 = sadd.s32 %s29, %s28
          %s332 = smul.addr %s331, 16
          %s333 = scalar_lea.hbm %s3, %s332
          %s335 = sshll.u32 %s296, 4
          %s336 = int_to_ptr.vmem [resolvable:$true] %s335
          %338 = dma.vmem_to_hbm [thread:$0]  %s336, 16, %s333, %s294
        $region40: #{tpu_custom_call.1} parent=23 // pred_fallthru
          _
      $region24: #{tpu_custom_call.1} parent=5 // pred_fallthru
        _
      %p339 = scmp.le.s32.totalorder 2, %s19
      // Predicated region
      $region41: #{tpu_custom_call.1} parent=5 // pred_check
        %p340 = pneg %p339
      $region42: #{tpu_custom_call.1} parent=5 // pred_check_branch
        %342 = sbr.rel (%p340) target = $region44
      $region43: #{tpu_custom_call.1} parent=5 // pred_region
        %s343 = ssub.s32 %s19, 2
        // Predicated region
        $region45: #{tpu_custom_call.1} parent=43 // pred_check
          %p344 = pneg %p90
        $region46: #{tpu_custom_call.1} parent=43 // pred_check_branch
          %346 = sbr.rel (%p344) target = $region48
        $region47: #{tpu_custom_call.1} parent=43 // pred_region
          %s347 = sand.u32 %s75, 1
          %s348 = scalar_lea.sflag [#allocation4], %s347
          %s349 = sand.u32 %s75, 1
          %s350 = smul.addr %s349, 2
          %s351 = scalar_lea.vmem [#allocation5], %s350
          %352 = dma.done %s348, 32
        $region48: #{tpu_custom_call.1} parent=43 // pred_fallthru
          _
        // Predicated region
        $region49: #{tpu_custom_call.1} parent=43 // pred_check
          %p353 = pneg %p118
        $region50: #{tpu_custom_call.1} parent=43 // pred_check_branch
          %355 = sbr.rel (%p353) target = $region52
        $region51: #{tpu_custom_call.1} parent=43 // pred_region
          %s356 = sand.u32 %s25, 1
          %s357 = scalar_lea.sflag [#allocation7], %s356
          %s358 = sand.u32 %s103, 1
          %s359 = scalar_lea.vmem [#allocation6], %s358
          %360 = dma.done %s357, 16
        $region52: #{tpu_custom_call.1} parent=43 // pred_fallthru
          _
        // Predicated region
        $region53: #{tpu_custom_call.1} parent=43 // pred_check
          %p361 = pneg %p146
        $region54: #{tpu_custom_call.1} parent=43 // pred_check_branch
          %363 = sbr.rel (%p361) target = $region56
        $region55: #{tpu_custom_call.1} parent=43 // pred_region
          %s364 = sand.u32 %s25, 1
          %s365 = scalar_lea.sflag [#allocation7], %s364
          %s366 = sand.u32 %s131, 1
          %s367 = scalar_lea.vmem [#allocation8], %s366
          %368 = dma.done %s365, 16
        $region56: #{tpu_custom_call.1} parent=43 // pred_fallthru
          _
      $region44: #{tpu_custom_call.1} parent=5 // pred_fallthru
        _
    $region6: #{tpu_custom_call.1} parent=1 // loop_footer
      %s23 = sadd.s32 1, %s19
    $region7: #{tpu_custom_call.1} parent=1 // loop_footer_branch
      %18 = sbr.rel target = $region3
    $region8: #{tpu_custom_call.1} parent=1 // loop_exit
      _
    %369 = vsyncpa [#allocation3], 1
    %s370 = scalar_lea.sflag [#allocation3], 1
    %371 = vsyncpa %s370, 1
    %372 = vsyncpa [#allocation4], 1
    %s373 = scalar_lea.sflag [#allocation4], 1
    %374 = vsyncpa %s373, 1
    %375 = vsyncpa [#allocation7], 1
    %s376 = scalar_lea.sflag [#allocation7], 1
    %377 = vsyncpa %s376, 1

</llo_original>
